<compile_context>
chip_gen: v6e
topology: v6e:2x2x1
jax: 0.10.0
libtpu: 0.0.40
codegen_flags: <defaults>
</compile_context>

<pallas_src>
import math

import jax
import jax.numpy as jnp
from jax.experimental import pallas as pl
from jax.experimental.pallas import tpu as pltpu

IN_FEATURES = 768   # fixed by the module (CLIP image embedding dim)
_TM_DEFAULT = 512   # rows per grid step (amortizes per-step overhead on v6e/v7x)
_TN_CAP = 2048      # max output-feature columns resident per grid step


def _round_up(x, m):
    return (x + m - 1) // m * m


def _linear_kernel(x_ref, w_ref, b_ref, o_ref):
    # x_ref: (tm, K) native dtype; w_ref: (K, tn) pre-transposed (MXU layout);
    # b_ref: (1, tn) float32; o_ref: (tm, tn).
    x = x_ref[...]
    w = w_ref[...]
    if x.dtype != w.dtype:
        # In-kernel cast (e.g. f32 -> bf16): VPU work hidden under the DMA,
        # avoids an unfused wrapper-side cast pass over x in HBM.
        x = x.astype(w.dtype)
    acc = jnp.dot(x, w, preferred_element_type=jnp.float32)   # f32 accumulation
    o_ref[...] = (acc + b_ref[...]).astype(o_ref.dtype)


def _default_compute_dtype():
    # bf16 by default on v5e (no native f32 MXU path, ~820 GB/s HBM); keep the
    # input dtype everywhere else.
    try:
        kind = jax.devices()[0].device_kind.lower()
    except Exception:
        return None
    if "v5e" in kind or "v5 lite" in kind or "v5litepod" in kind:
        return jnp.bfloat16
    return None


def _vmem_capacity_bytes():
    try:
        return int(pltpu.get_tpu_info().vmem_capacity_bytes)
    except Exception:
        return 64 * 2**20   # conservative fallback (v7x per-TC physical VMEM)


def linear_proj(x, weight, bias, *, tm=_TM_DEFAULT, compute_dtype="auto"):
    """torch.nn.Linear(768, context_dim) forward: y = x @ W.T + b on the last dim.

    x: (..., 768); weight: (context_dim, 768); bias: (context_dim,).
    compute_dtype: "auto" (bf16 on v5e, native elsewhere), None (native dtype),
        or an explicit dtype such as jnp.bfloat16. Accumulation is always f32.
    """
    ctx_dim, in_dim = weight.shape
    assert in_dim == IN_FEATURES, "LinearProj expects 768 input features"
    out_dtype = x.dtype
    lead_shape = x.shape[:-1]
    m = math.prod(lead_shape)

    if m == 0:   # empty leading dims: nothing to do
        return jnp.zeros((*lead_shape, ctx_dim), dtype=out_dtype)

    if isinstance(compute_dtype, str) and compute_dtype == "auto":
        compute_dtype = _default_compute_dtype()

    x2d = x.reshape(m, in_dim)              # free reshape, no HBM pass
    weight_t = weight.T                      # one-time (768, ctx_dim) transpose
    if compute_dtype is not None:
        weight_t = weight_t.astype(compute_dtype)   # fused with the transpose
    bias_f32 = bias.astype(jnp.float32)

    # Pad output features only when ctx_dim is not already a 128 multiple.
    n = ctx_dim
    if ctx_dim % 128 != 0:
        n = _round_up(ctx_dim, 128)
        weight_t = jnp.pad(weight_t, ((0, 0), (0, n - ctx_dim)))
        bias_f32 = jnp.pad(bias_f32, (0, n - ctx_dim))
    b2d = bias_f32.reshape(1, n)

    # Row tile: big for large inputs, whole (sublane-rounded) row count for
    # small ones. No row padding -- Pallas masks the ragged last block.
    sublane = {1: 32, 2: 16, 4: 8}[jnp.dtype(x2d.dtype).itemsize]
    tm_eff = min(_round_up(tm, sublane), _round_up(m, sublane))
    grid_m = pl.cdiv(m, tm_eff)

    # Column tile: bound the resident weight block for very large ctx_dim.
    tn = min(n, _TN_CAP)                     # n is a 128 multiple, so tn is too
    grid_n = pl.cdiv(n, tn)

    x_item = jnp.dtype(x2d.dtype).itemsize
    w_item = jnp.dtype(weight_t.dtype).itemsize
    out_item = jnp.dtype(out_dtype).itemsize

    # VMEM budget: double-buffered x / out tiles + (pipelined) weight and bias
    # blocks, with 2x headroom, capped generation-aware below physical VMEM.
    vmem_need = (2 * tm_eff * in_dim * x_item
                 + 2 * in_dim * tn * w_item
                 + 2 * tn * 4
                 + 2 * tm_eff * tn * out_item)
    vmem_cap = _vmem_capacity_bytes()
    vmem_limit = int(min(max(2 * vmem_need, 32 * 2**20),
                         max(vmem_cap - 16 * 2**20, 16 * 2**20)))

    cost = pl.CostEstimate(
        flops=2 * m * in_dim * ctx_dim,
        transcendentals=0,
        bytes_accessed=(m * in_dim * x_item
                        + in_dim * n * w_item
                        + n * 4
                        + m * ctx_dim * out_item),
    )

    out2d = pl.pallas_call(
        _linear_kernel,
        out_shape=jax.ShapeDtypeStruct((m, n), out_dtype),
        grid_spec=pltpu.PrefetchScalarGridSpec(
            num_scalar_prefetch=0,
            grid=(grid_m, grid_n),
            in_specs=[
                # x block depends only on the outer (row) axis -> fetched once.
                pl.BlockSpec((tm_eff, in_dim), lambda i, j: (i, 0)),
                # Weight / bias blocks depend only on the N axis; grid-invariant
                # (fetched once) whenever grid_n == 1, i.e. ctx_dim <= 2048.
                pl.BlockSpec((in_dim, tn), lambda i, j: (0, j)),
                pl.BlockSpec((1, tn), lambda i, j: (0, j)),
            ],
            out_specs=pl.BlockSpec((tm_eff, tn), lambda i, j: (i, j)),
        ),
        compiler_params=pltpu.CompilerParams(
            # Both axes embarrassingly parallel -> v7x's two TensorCores split
            # the work; neutral on single-TC v5e/v6e.
            dimension_semantics=("parallel", "parallel"),
            vmem_limit_bytes=vmem_limit,
        ),
        cost_estimate=cost,
    )(x2d, weight_t, b2d)

    if n != ctx_dim:
        out2d = out2d[:, :ctx_dim]
    return out2d.reshape(*lead_shape, ctx_dim)


if __name__ == "__main__":
    key = jax.random.PRNGKey(0)
    k_x, k_w, k_b, k_x2 = jax.random.split(key, 4)

    batch, seq = 2, 8
    context_dim = 128   # module hyperparameter

    # Deterministic synthetic parameters (PyTorch nn.Linear shapes).
    x = jax.random.normal(k_x, (batch, seq, IN_FEATURES), dtype=jnp.float32)
    weight = jax.random.normal(k_w, (context_dim, IN_FEATURES), dtype=jnp.float32) * 0.02
    bias = jax.random.normal(k_b, (context_dim,), dtype=jnp.float32) * 0.01

    # Reference (same semantics as torch.nn.Linear).
    ref = x @ weight.T + bias

    # f32 path (compute_dtype=None forces native-dtype compute on every chip).
    out = jax.block_until_ready(linear_proj(x, weight, bias, compute_dtype=None))
    assert out.shape == (batch, seq, context_dim)
    assert jnp.allclose(out, ref, atol=1e-4, rtol=1e-4), "f32 mismatch vs reference"

    # bf16 MXU path (f32 accumulation, in-kernel cast) -- looser tolerance.
    out_bf16 = jax.block_until_ready(
        linear_proj(x, weight, bias, compute_dtype=jnp.bfloat16))
    assert out_bf16.shape == (batch, seq, context_dim)
    assert jnp.allclose(out_bf16, ref, atol=2e-2, rtol=2e-2), "bf16 mismatch vs reference"

    # Ragged row count (m=15, not a sublane multiple) + ctx_dim not a multiple
    # of 128: exercises the masked last row block and the N-padding fallback.
    ctx2 = 96
    x2 = jax.random.normal(k_x2, (3, 5, IN_FEATURES), dtype=jnp.float32)
    w2 = jax.random.normal(k_w, (ctx2, IN_FEATURES), dtype=jnp.float32) * 0.02
    b2 = jax.random.normal(k_b, (ctx2,), dtype=jnp.float32) * 0.01
    ref2 = x2 @ w2.T + b2
    out2 = jax.block_until_ready(linear_proj(x2, w2, b2, compute_dtype=None))
    assert out2.shape == (3, 5, ctx2)
    assert jnp.allclose(out2, ref2, atol=1e-4, rtol=1e-4), "ragged/non-128 mismatch"

    print("KERNEL_OK")
</pallas_src>

<mosaic_0001>
module attributes {stable_mosaic.version = 11 : i64} {
  func.func @_linear_kernel(%arg0: i32, %arg1: i32, %arg2: memref<16x768xf32, #tpu.memory_space<vmem>>, %arg3: memref<768x128xf32, #tpu.memory_space<vmem>>, %arg4: memref<1x128xf32, #tpu.memory_space<vmem>>, %arg5: memref<16x128xf32, #tpu.memory_space<vmem>>) attributes {dimension_semantics = [#tpu.dimension_semantics<parallel>, #tpu.dimension_semantics<parallel>], iteration_bounds = array<i64: 1, 1>, scalar_prefetch = 0 : i64, scratch_operands = 0 : i64, tpu.core_type = #tpu.core_type<tc>, window_params = [{transform_indices = @transform_0, window_bounds = array<i64: 16, 768>}, {transform_indices = @transform_1, window_bounds = array<i64: 768, 128>}, {transform_indices = @transform_2, window_bounds = array<i64: 1, 128>}, {transform_indices = @transform_3, window_bounds = array<i64: 16, 128>}]} {
    %c0 = arith.constant 0 : index
    %c0_0 = arith.constant 0 : index
    %0 = vector.load %arg2[%c0, %c0_0] : memref<16x768xf32, #tpu.memory_space<vmem>>, vector<16x768xf32>
    %c0_1 = arith.constant 0 : index
    %c0_2 = arith.constant 0 : index
    %1 = vector.load %arg3[%c0_1, %c0_2] : memref<768x128xf32, #tpu.memory_space<vmem>>, vector<768x128xf32>
    %cst = arith.constant dense<0.000000e+00> : vector<16x128xf32>
    %2 = tpu.matmul %0, %1, %cst {dimension_numbers = #tpu.dot_dimension_numbers<[1], [0], [0], [1], [0, 0, 1, 1], [], []>} : vector<16x768xf32>, vector<768x128xf32>, vector<16x128xf32> -> vector<16x128xf32>
    %c0_3 = arith.constant 0 : index
    %c0_4 = arith.constant 0 : index
    %3 = vector.load %arg4[%c0_3, %c0_4] : memref<1x128xf32, #tpu.memory_space<vmem>>, vector<1x128xf32>
    %4 = vector.broadcast %3 : vector<1x128xf32> to vector<16x128xf32>
    %5 = arith.addf %2, %4 : vector<16x128xf32>
    %c0_5 = arith.constant 0 : index
    %c0_6 = arith.constant 0 : index
    %6 = vector.load %arg5[%c0_5, %c0_6] : memref<16x128xf32, #tpu.memory_space<vmem>>, vector<16x128xf32>
    tpu.vector_store %arg5[%c0_5, %c0_6], %5 {strides = array<i32>} : memref<16x128xf32, #tpu.memory_space<vmem>>, vector<16x128xf32>,
    return
  }
  func.func @transform_0(%arg0: i32, %arg1: i32) -> (i32, i32) {
    %c0_i32 = arith.constant 0 : i32
    %c0_i32_0 = arith.constant 0 : i32
    return %arg0, %c0_i32 : i32, i32
  }
  func.func @transform_1(%arg0: i32, %arg1: i32) -> (i32, i32) {
    %c0_i32 = arith.constant 0 : i32
    %c0_i32_0 = arith.constant 0 : i32
    return %c0_i32, %arg1 : i32, i32
  }
  func.func @transform_2(%arg0: i32, %arg1: i32) -> (i32, i32) {
    %c0_i32 = arith.constant 0 : i32
    %c0_i32_0 = arith.constant 0 : i32
    return %c0_i32, %arg1 : i32, i32
  }
  func.func @transform_3(%arg0: i32, %arg1: i32) -> (i32, i32) {
    %c0_i32 = arith.constant 0 : i32
    return %arg0, %arg1 : i32, i32
  }
}

</mosaic_0001>

<llo_original>
// kernel: tpu_custom_call.1
$region0: #{tpu_custom_call.1}
  #allocation0 [shape = 'u32[]', space=smem, size = 0x4, offset = 0x4, fixed_abs, tag = 'smem constant byte address 0x4 - core index']
  #allocation1 [shape = 'u32[144,128]{1,0:T(1,128)}', space=vmem, size = 0x12000, scoped, tag = 'internal scratch']
  %s0 = inlined_call_operand.hbm [shape: f32[16,768], index: 0, kind: input, shape index: {}]
  %s1 = inlined_call_operand.hbm [shape: f32[768,128], index: 1, kind: input, shape index: {}]
  %s2 = inlined_call_operand.vmem [shape: f32[1,128], index: 2, kind: input, shape index: {}]
  %s3 = inlined_call_operand.hbm [shape: f32[16,128], index: 3, kind: output, shape index: {}]
  %s4 = sld [smem:[#allocation0]]
  $region30: #{tpu_custom_call.1} parent=0
    _
  %s6 = ssub.s32 1, %s4
  %s7 = scalar_select 0, %s6, %s4
  $region1: #{tpu_custom_call.1} parent=0
    #allocation2 [shape = 'u8[49152]{0}', space=vmem, size = 0xc000, scoped, tag = 'input window, operand 0, single buffered']
    #allocation3 [shape = 's32[1]{0}', space=sflag, size = 0x4, scoped, tag = 'scoped memory for tpu_custom_call.1']
    #allocation4 [shape = 's32[1]{0}', space=sflag, size = 0x4, scoped, tag = 'scoped memory for tpu_custom_call.1']
    #allocation5 [shape = 'u8[393216]{0}', space=vmem, size = 0x60000, scoped, tag = 'input window, operand 1, single buffered']
    #allocation6 [shape = 's32[1]{0}', space=sflag, size = 0x4, scoped, tag = 'scoped memory for tpu_custom_call.1']
    #allocation7 [shape = 'u8[8192]{0}', space=vmem, size = 0x2000, scoped, tag = 'output window, operand 0, single buffered']
    %8 = vsyncpa [#allocation3], 0
    %9 = vsyncpa [#allocation6], 0
    %10 = vsyncpa [#allocation4], 0
    // Predicated region
    $region2: #{tpu_custom_call.1} parent=1 // pred_check
      _
    $region3: #{tpu_custom_call.1} parent=1 // pred_check_branch
      %12 = sbr.rel (0) target = $region5
    $region4: #{tpu_custom_call.1} parent=1 // pred_region
      %s14 = ssub.s32 1536, 1536
      %15 = vsyncadd [#allocation3], %s14
      %s16 = sshll.u32 [#allocation2], 4
      %s17 = int_to_ptr.vmem [resolvable:$true] %s16
      %22 = dma.hbm_to_vmem [thread:$0]  %s0, 1536, %s17, [#allocation3], 768, 768, 48
    $region5: #{tpu_custom_call.1} parent=1 // pred_fallthru
      _
    // Predicated region
    $region6: #{tpu_custom_call.1} parent=1 // pred_check
      _
    $region7: #{tpu_custom_call.1} parent=1 // pred_check_branch
      %24 = sbr.rel (0) target = $region9
    $region8: #{tpu_custom_call.1} parent=1 // pred_region
      %s26 = ssub.s32 12288, 12288
      %27 = vsyncadd [#allocation6], %s26
      %s28 = sshll.u32 [#allocation5], 4
      %s29 = int_to_ptr.vmem [resolvable:$true] %s28
      %34 = dma.hbm_to_vmem [thread:$0]  %s1, 12288, %s29, [#allocation6], 128, 128, 8
    $region9: #{tpu_custom_call.1} parent=1 // pred_fallthru
      _
    // Predicated region
    $region10: #{tpu_custom_call.1} parent=1 // pred_check
      _
    $region11: #{tpu_custom_call.1} parent=1 // pred_check_branch
      %36 = sbr.rel (0) target = $region13
    $region12: #{tpu_custom_call.1} parent=1 // pred_region
      _
    $region13: #{tpu_custom_call.1} parent=1 // pred_fallthru
      _
    // Predicated region
    $region14: #{tpu_custom_call.1} parent=1 // pred_check
      _
    $region15: #{tpu_custom_call.1} parent=1 // pred_check_branch
      %38 = sbr.rel (0) target = $region17
    $region16: #{tpu_custom_call.1} parent=1 // pred_region
      %39 = dma.done [#allocation3], 1536
    $region17: #{tpu_custom_call.1} parent=1 // pred_fallthru
      _
    // Predicated region
    $region18: #{tpu_custom_call.1} parent=1 // pred_check
      _
    $region19: #{tpu_custom_call.1} parent=1 // pred_check_branch
      %41 = sbr.rel (0) target = $region21
    $region20: #{tpu_custom_call.1} parent=1 // pred_region
      %42 = dma.done [#allocation6], 12288
    $region21: #{tpu_custom_call.1} parent=1 // pred_fallthru
      _
    %v43 = vld [vmem:[#allocation2] sm:$0xff]
    %v44 = vld [vmem:[#allocation2 + $0x8] sm:$0xff]
    %v45 = vld [vmem:[#allocation2 + $0x10] sm:$0xff]
    %v46 = vld [vmem:[#allocation2 + $0x18] sm:$0xff]
    %v47 = vld [vmem:[#allocation2 + $0x20] sm:$0xff]
    %v48 = vld [vmem:[#allocation2 + $0x28] sm:$0xff]
    %v49 = vld [vmem:[#allocation2 + $0x30] sm:$0xff]
    %v50 = vld [vmem:[#allocation2 + $0x38] sm:$0xff]
    %v51 = vld [vmem:[#allocation2 + $0x40] sm:$0xff]
    %v52 = vld [vmem:[#allocation2 + $0x48] sm:$0xff]
    %v53 = vld [vmem:[#allocation2 + $0x50] sm:$0xff]
    %v54 = vld [vmem:[#allocation2 + $0x58] sm:$0xff]
    %v55 = vld [vmem:[#allocation5] sm:$0xff]
    %v56 = vld [vmem:[#allocation5 + $0x8] sm:$0xff]
    %v57 = vld [vmem:[#allocation5 + $0x10] sm:$0xff]
    %v58 = vld [vmem:[#allocation5 + $0x18] sm:$0xff]
    %v59 = vld [vmem:[#allocation5 + $0x20] sm:$0xff]
    %v60 = vld [vmem:[#allocation5 + $0x28] sm:$0xff]
    %v61 = vld [vmem:[#allocation5 + $0x30] sm:$0xff]
    %v62 = vld [vmem:[#allocation5 + $0x38] sm:$0xff]
    %v63 = vld [vmem:[#allocation5 + $0x40] sm:$0xff]
    %v64 = vld [vmem:[#allocation5 + $0x48] sm:$0xff]
    %v65 = vld [vmem:[#allocation5 + $0x50] sm:$0xff]
    %v66 = vld [vmem:[#allocation5 + $0x58] sm:$0xff]
    %v67 = vld [vmem:[#allocation5 + $0x60] sm:$0xff]
    %v68 = vld [vmem:[#allocation5 + $0x68] sm:$0xff]
    %v69 = vld [vmem:[#allocation5 + $0x70] sm:$0xff]
    %v70 = vld [vmem:[#allocation5 + $0x78] sm:$0xff]
    %v71 = vld [vmem:[#allocation5 + $0x80] sm:$0xff]
    %v72 = vld [vmem:[#allocation5 + $0x88] sm:$0xff]
    %v73 = vld [vmem:[#allocation5 + $0x90] sm:$0xff]
    %v74 = vld [vmem:[#allocation5 + $0x98] sm:$0xff]
    %v75 = vld [vmem:[#allocation5 + $0xa0] sm:$0xff]
    %v76 = vld [vmem:[#allocation5 + $0xa8] sm:$0xff]
    %v77 = vld [vmem:[#allocation5 + $0xb0] sm:$0xff]
    %v78 = vld [vmem:[#allocation5 + $0xb8] sm:$0xff]
    %v79 = vld [vmem:[#allocation5 + $0xc0] sm:$0xff]
    %v80 = vld [vmem:[#allocation5 + $0xc8] sm:$0xff]
    %v81 = vld [vmem:[#allocation5 + $0xd0] sm:$0xff]
    %v82 = vld [vmem:[#allocation5 + $0xd8] sm:$0xff]
    %v83 = vld [vmem:[#allocation5 + $0xe0] sm:$0xff]
    %v84 = vld [vmem:[#allocation5 + $0xe8] sm:$0xff]
    %v85 = vld [vmem:[#allocation5 + $0xf0] sm:$0xff]
    %v86 = vld [vmem:[#allocation5 + $0xf8] sm:$0xff]
    %v87 = vld [vmem:[#allocation5 + $0x100] sm:$0xff]
    %v88 = vld [vmem:[#allocation5 + $0x108] sm:$0xff]
    %v89 = vld [vmem:[#allocation5 + $0x110] sm:$0xff]
    %v90 = vld [vmem:[#allocation5 + $0x118] sm:$0xff]
    %v91 = vld [vmem:[#allocation5 + $0x120] sm:$0xff]
    %v92 = vld [vmem:[#allocation5 + $0x128] sm:$0xff]
    %v93 = vld [vmem:[#allocation5 + $0x130] sm:$0xff]
    %v94 = vld [vmem:[#allocation5 + $0x138] sm:$0xff]
    %v95 = vld [vmem:[#allocation5 + $0x140] sm:$0xff]
    %v96 = vld [vmem:[#allocation5 + $0x148] sm:$0xff]
    %v97 = vld [vmem:[#allocation5 + $0x150] sm:$0xff]
    %v98 = vld [vmem:[#allocation5 + $0x158] sm:$0xff]
    %v99 = vld [vmem:[#allocation5 + $0x160] sm:$0xff]
    %v100 = vld [vmem:[#allocation5 + $0x168] sm:$0xff]
    %v101 = vld [vmem:[#allocation5 + $0x170] sm:$0xff]
    %v102 = vld [vmem:[#allocation5 + $0x178] sm:$0xff]
    %v103 = vld [vmem:[#allocation5 + $0x180] sm:$0xff]
    %v104 = vld [vmem:[#allocation5 + $0x188] sm:$0xff]
    %v105 = vld [vmem:[#allocation5 + $0x190] sm:$0xff]
    %v106 = vld [vmem:[#allocation5 + $0x198] sm:$0xff]
    %v107 = vld [vmem:[#allocation5 + $0x1a0] sm:$0xff]
    %v108 = vld [vmem:[#allocation5 + $0x1a8] sm:$0xff]
    %v109 = vld [vmem:[#allocation5 + $0x1b0] sm:$0xff]
    %v110 = vld [vmem:[#allocation5 + $0x1b8] sm:$0xff]
    %v111 = vld [vmem:[#allocation5 + $0x1c0] sm:$0xff]
    %v112 = vld [vmem:[#allocation5 + $0x1c8] sm:$0xff]
    %v113 = vld [vmem:[#allocation5 + $0x1d0] sm:$0xff]
    %v114 = vld [vmem:[#allocation5 + $0x1d8] sm:$0xff]
    %v115 = vld [vmem:[#allocation5 + $0x1e0] sm:$0xff]
    %v116 = vld [vmem:[#allocation5 + $0x1e8] sm:$0xff]
    %v117 = vld [vmem:[#allocation5 + $0x1f0] sm:$0xff]
    %v118 = vld [vmem:[#allocation5 + $0x1f8] sm:$0xff]
    %v119 = vld [vmem:[#allocation5 + $0x200] sm:$0xff]
    %v120 = vld [vmem:[#allocation5 + $0x208] sm:$0xff]
    %v121 = vld [vmem:[#allocation5 + $0x210] sm:$0xff]
    %v122 = vld [vmem:[#allocation5 + $0x218] sm:$0xff]
    %v123 = vld [vmem:[#allocation5 + $0x220] sm:$0xff]
    %v124 = vld [vmem:[#allocation5 + $0x228] sm:$0xff]
    %v125 = vld [vmem:[#allocation5 + $0x230] sm:$0xff]
    %v126 = vld [vmem:[#allocation5 + $0x238] sm:$0xff]
    %v127 = vld [vmem:[#allocation5 + $0x240] sm:$0xff]
    %v128 = vld [vmem:[#allocation5 + $0x248] sm:$0xff]
    %v129 = vld [vmem:[#allocation5 + $0x250] sm:$0xff]
    %v130 = vld [vmem:[#allocation5 + $0x258] sm:$0xff]
    %v131 = vld [vmem:[#allocation5 + $0x260] sm:$0xff]
    %v132 = vld [vmem:[#allocation5 + $0x268] sm:$0xff]
    %v133 = vld [vmem:[#allocation5 + $0x270] sm:$0xff]
    %v134 = vld [vmem:[#allocation5 + $0x278] sm:$0xff]
    %v135 = vld [vmem:[#allocation5 + $0x280] sm:$0xff]
    %v136 = vld [vmem:[#allocation5 + $0x288] sm:$0xff]
    %v137 = vld [vmem:[#allocation5 + $0x290] sm:$0xff]
    %v138 = vld [vmem:[#allocation5 + $0x298] sm:$0xff]
    %v139 = vld [vmem:[#allocation5 + $0x2a0] sm:$0xff]
    %v140 = vld [vmem:[#allocation5 + $0x2a8] sm:$0xff]
    %v141 = vld [vmem:[#allocation5 + $0x2b0] sm:$0xff]
    %v142 = vld [vmem:[#allocation5 + $0x2b8] sm:$0xff]
    %v143 = vld [vmem:[#allocation5 + $0x2c0] sm:$0xff]
    %v144 = vld [vmem:[#allocation5 + $0x2c8] sm:$0xff]
    %v145 = vld [vmem:[#allocation5 + $0x2d0] sm:$0xff]
    %v146 = vld [vmem:[#allocation5 + $0x2d8] sm:$0xff]
    %v147 = vld [vmem:[#allocation5 + $0x2e0] sm:$0xff]
    %v148 = vld [vmem:[#allocation5 + $0x2e8] sm:$0xff]
    %v149 = vld [vmem:[#allocation5 + $0x2f0] sm:$0xff]
    %v150 = vld [vmem:[#allocation5 + $0x2f8] sm:$0xff]
    %v151 = vld [vmem:[%s2] sm:$0x1]
    %v153 = vlaneseq
    %v154 = vshrl.u32 %v153, 7
    %v155 = vsub.s32 0, %v154
    %v156 = vrot.slane %v151, %v155
    %158 = vmatprep.subr.mxu0 0.0
    %159 = vmatpush1.msra.mxu0 %v70
    %160 = vmatprep.subr.mxu0 0.0
    %161 = vmatpush1.msra.mxu0 %v69
    %162 = vmatprep.subr.mxu0 0.0
    %163 = vmatpush1.msra.mxu0 %v68
    %164 = vmatprep.subr.mxu0 0.0
    %165 = vmatpush1.msra.mxu0 %v67
    %166 = vmatprep.subr.mxu0 0.0
    %167 = vmatpush1.msra.mxu0 %v66
    %168 = vmatprep.subr.mxu0 0.0
    %169 = vmatpush1.msra.mxu0 %v65
    %170 = vmatprep.subr.mxu0 0.0
    %171 = vmatpush1.msra.mxu0 %v64
    %172 = vmatprep.subr.mxu0 0.0
    %173 = vmatpush1.msra.mxu0 %v63
    %174 = vmatprep.subr.mxu0 0.0
    %175 = vmatpush1.msra.mxu0 %v62
    %176 = vmatprep.subr.mxu0 0.0
    %177 = vmatpush1.msra.mxu0 %v61
    %178 = vmatprep.subr.mxu0 0.0
    %179 = vmatpush1.msra.mxu0 %v60
    %180 = vmatprep.subr.mxu0 0.0
    %181 = vmatpush1.msra.mxu0 %v59
    %182 = vmatprep.subr.mxu0 0.0
    %183 = vmatpush1.msra.mxu0 %v58
    %184 = vmatprep.subr.mxu0 0.0
    %185 = vmatpush1.msra.mxu0 %v57
    %186 = vmatprep.subr.mxu0 0.0
    %187 = vmatpush1.msra.mxu0 %v56
    %188 = vmatprep.subr.mxu0 0.0
    %189 = vmatpush1.msra.mxu0 %v55
    %190 = vmatprep.subr.mxu0 0.0
    %191 = vmatpush2.msra.mxu0 %v86
    %192 = vmatprep.subr.mxu0 0.0
    %193 = vmatpush2.msra.mxu0 %v85
    %194 = vmatprep.subr.mxu0 0.0
    %195 = vmatpush2.msra.mxu0 %v84
    %196 = vmatprep.subr.mxu0 0.0
    %197 = vmatpush2.msra.mxu0 %v83
    %198 = vmatprep.subr.mxu0 0.0
    %199 = vmatpush2.msra.mxu0 %v82
    %200 = vmatprep.subr.mxu0 0.0
    %201 = vmatpush2.msra.mxu0 %v81
    %202 = vmatprep.subr.mxu0 0.0
    %203 = vmatpush2.msra.mxu0 %v80
    %204 = vmatprep.subr.mxu0 0.0
    %205 = vmatpush2.msra.mxu0 %v79
    %206 = vmatprep.subr.mxu0 0.0
    %207 = vmatpush2.msra.mxu0 %v78
    %208 = vmatprep.subr.mxu0 0.0
    %209 = vmatpush2.msra.mxu0 %v77
    %210 = vmatprep.subr.mxu0 0.0
    %211 = vmatpush2.msra.mxu0 %v76
    %212 = vmatprep.subr.mxu0 0.0
    %213 = vmatpush2.msra.mxu0 %v75
    %214 = vmatprep.subr.mxu0 0.0
    %215 = vmatpush2.msra.mxu0 %v74
    %216 = vmatprep.subr.mxu0 0.0
    %217 = vmatpush2.msra.mxu0 %v73
    %218 = vmatprep.subr.mxu0 0.0
    %219 = vmatpush2.msra.mxu0 %v72
    %220 = vmatprep.subr.mxu0 0.0
    %221 = vmatpush2.msra.mxu0 %v71
    %222 = vmatprep.mubr.f32.mxu0 %v44
    %223 = vmatmul.mubr.f32.gmra.mxu0 %v43
    %v224 = vpop.f32.mrf.mxu0
    %v225 = vadd.f32 %v156, %v224
    %v226 = vpop.f32.mrf.mxu0
    %227 = vmatprep.mubr.f32.mxu0 %v50
    %228 = vmatmul.mubr.f32.gmra.mxu0 %v49
    %v229 = vpop.f32.mrf.mxu0
    %v230 = vadd.f32 %v156, %v229
    %v231 = vpop.f32.mrf.mxu0
    %232 = vdwg.mxu0
    %233 = vmatprep.subr.mxu0 0.0
    %234 = vmatpush1.msra.mxu0 %v102
    %235 = vmatprep.subr.mxu0 0.0
    %236 = vmatpush1.msra.mxu0 %v101
    %237 = vmatprep.subr.mxu0 0.0
    %238 = vmatpush1.msra.mxu0 %v100
    %239 = vmatprep.subr.mxu0 0.0
    %240 = vmatpush1.msra.mxu0 %v99
    %241 = vmatprep.subr.mxu0 0.0
    %242 = vmatpush1.msra.mxu0 %v98
    %243 = vmatprep.subr.mxu0 0.0
    %244 = vmatpush1.msra.mxu0 %v97
    %245 = vmatprep.subr.mxu0 0.0
    %246 = vmatpush1.msra.mxu0 %v96
    %247 = vmatprep.subr.mxu0 0.0
    %248 = vmatpush1.msra.mxu0 %v95
    %249 = vmatprep.subr.mxu0 0.0
    %250 = vmatpush1.msra.mxu0 %v94
    %251 = vmatprep.subr.mxu0 0.0
    %252 = vmatpush1.msra.mxu0 %v93
    %253 = vmatprep.subr.mxu0 0.0
    %254 = vmatpush1.msra.mxu0 %v92
    %255 = vmatprep.subr.mxu0 0.0
    %256 = vmatpush1.msra.mxu0 %v91
    %257 = vmatprep.subr.mxu0 0.0
    %258 = vmatpush1.msra.mxu0 %v90
    %259 = vmatprep.subr.mxu0 0.0
    %260 = vmatpush1.msra.mxu0 %v89
    %261 = vmatprep.subr.mxu0 0.0
    %262 = vmatpush1.msra.mxu0 %v88
    %263 = vmatprep.subr.mxu0 0.0
    %264 = vmatpush1.msra.mxu0 %v87
    %265 = vmatprep.subr.mxu0 0.0
    %266 = vmatpush2.msra.mxu0 %v118
    %267 = vmatprep.subr.mxu0 0.0
    %268 = vmatpush2.msra.mxu0 %v117
    %269 = vmatprep.subr.mxu0 0.0
    %270 = vmatpush2.msra.mxu0 %v116
    %271 = vmatprep.subr.mxu0 0.0
    %272 = vmatpush2.msra.mxu0 %v115
    %273 = vmatprep.subr.mxu0 0.0
    %274 = vmatpush2.msra.mxu0 %v114
    %275 = vmatprep.subr.mxu0 0.0
    %276 = vmatpush2.msra.mxu0 %v113
    %277 = vmatprep.subr.mxu0 0.0
    %278 = vmatpush2.msra.mxu0 %v112
    %279 = vmatprep.subr.mxu0 0.0
    %280 = vmatpush2.msra.mxu0 %v111
    %281 = vmatprep.subr.mxu0 0.0
    %282 = vmatpush2.msra.mxu0 %v110
    %283 = vmatprep.subr.mxu0 0.0
    %284 = vmatpush2.msra.mxu0 %v109
    %285 = vmatprep.subr.mxu0 0.0
    %286 = vmatpush2.msra.mxu0 %v108
    %287 = vmatprep.subr.mxu0 0.0
    %288 = vmatpush2.msra.mxu0 %v107
    %289 = vmatprep.subr.mxu0 0.0
    %290 = vmatpush2.msra.mxu0 %v106
    %291 = vmatprep.subr.mxu0 0.0
    %292 = vmatpush2.msra.mxu0 %v105
    %293 = vmatprep.subr.mxu0 0.0
    %294 = vmatpush2.msra.mxu0 %v104
    %295 = vmatprep.subr.mxu0 0.0
    %296 = vmatpush2.msra.mxu0 %v103
    %297 = vmatprep.mubr.f32.mxu0 %v46
    %298 = vmatmul.mubr.f32.gmra.mxu0 %v45
    %v299 = vpop.f32.mrf.mxu0
    %v300 = vadd.f32 %v225, %v299
    %v301 = vpop.f32.mrf.mxu0
    %302 = vmatprep.mubr.f32.mxu0 %v52
    %303 = vmatmul.mubr.f32.gmra.mxu0 %v51
    %v304 = vpop.f32.mrf.mxu0
    %v305 = vadd.f32 %v230, %v304
    %v306 = vpop.f32.mrf.mxu0
    %307 = vdwg.mxu0
    %308 = vmatprep.subr.mxu0 0.0
    %309 = vmatpush1.msra.mxu0 %v134
    %310 = vmatprep.subr.mxu0 0.0
    %311 = vmatpush1.msra.mxu0 %v133
    %312 = vmatprep.subr.mxu0 0.0
    %313 = vmatpush1.msra.mxu0 %v132
    %314 = vmatprep.subr.mxu0 0.0
    %315 = vmatpush1.msra.mxu0 %v131
    %316 = vmatprep.subr.mxu0 0.0
    %317 = vmatpush1.msra.mxu0 %v130
    %318 = vmatprep.subr.mxu0 0.0
    %319 = vmatpush1.msra.mxu0 %v129
    %320 = vmatprep.subr.mxu0 0.0
    %321 = vmatpush1.msra.mxu0 %v128
    %322 = vmatprep.subr.mxu0 0.0
    %323 = vmatpush1.msra.mxu0 %v127
    %324 = vmatprep.subr.mxu0 0.0
    %325 = vmatpush1.msra.mxu0 %v126
    %326 = vmatprep.subr.mxu0 0.0
    %327 = vmatpush1.msra.mxu0 %v125
    %328 = vmatprep.subr.mxu0 0.0
    %329 = vmatpush1.msra.mxu0 %v124
    %330 = vmatprep.subr.mxu0 0.0
    %331 = vmatpush1.msra.mxu0 %v123
    %332 = vmatprep.subr.mxu0 0.0
    %333 = vmatpush1.msra.mxu0 %v122
    %334 = vmatprep.subr.mxu0 0.0
    %335 = vmatpush1.msra.mxu0 %v121
    %336 = vmatprep.subr.mxu0 0.0
    %337 = vmatpush1.msra.mxu0 %v120
    %338 = vmatprep.subr.mxu0 0.0
    %339 = vmatpush1.msra.mxu0 %v119
    %340 = vmatprep.subr.mxu0 0.0
    %341 = vmatpush2.msra.mxu0 %v150
    %342 = vmatprep.subr.mxu0 0.0
    %343 = vmatpush2.msra.mxu0 %v149
    %344 = vmatprep.subr.mxu0 0.0
    %345 = vmatpush2.msra.mxu0 %v148
    %346 = vmatprep.subr.mxu0 0.0
    %347 = vmatpush2.msra.mxu0 %v147
    %348 = vmatprep.subr.mxu0 0.0
    %349 = vmatpush2.msra.mxu0 %v146
    %350 = vmatprep.subr.mxu0 0.0
    %351 = vmatpush2.msra.mxu0 %v145
    %352 = vmatprep.subr.mxu0 0.0
    %353 = vmatpush2.msra.mxu0 %v144
    %354 = vmatprep.subr.mxu0 0.0
    %355 = vmatpush2.msra.mxu0 %v143
    %356 = vmatprep.subr.mxu0 0.0
    %357 = vmatpush2.msra.mxu0 %v142
    %358 = vmatprep.subr.mxu0 0.0
    %359 = vmatpush2.msra.mxu0 %v141
    %360 = vmatprep.subr.mxu0 0.0
    %361 = vmatpush2.msra.mxu0 %v140
    %362 = vmatprep.subr.mxu0 0.0
    %363 = vmatpush2.msra.mxu0 %v139
    %364 = vmatprep.subr.mxu0 0.0
    %365 = vmatpush2.msra.mxu0 %v138
    %366 = vmatprep.subr.mxu0 0.0
    %367 = vmatpush2.msra.mxu0 %v137
    %368 = vmatprep.subr.mxu0 0.0
    %369 = vmatpush2.msra.mxu0 %v136
    %370 = vmatprep.subr.mxu0 0.0
    %371 = vmatpush2.msra.mxu0 %v135
    %372 = vmatprep.mubr.f32.mxu0 %v48
    %373 = vmatmul.mubr.f32.gmra.mxu0 %v47
    %v374 = vpop.f32.mrf.mxu0
    %v375 = vadd.f32 %v300, %v374
    %v376 = vpop.f32.mrf.mxu0
    %377 = vmatprep.mubr.f32.mxu0 %v54
    %378 = vmatmul.mubr.f32.gmra.mxu0 %v53
    %v379 = vpop.f32.mrf.mxu0
    %v380 = vadd.f32 %v305, %v379
    %v381 = vpop.f32.mrf.mxu0
    %382 = vdwg.mxu0
    %383 = vst [vmem:[#allocation7] sm:$0xff] %v375
    %384 = vst [vmem:[#allocation7 + $0x8] sm:$0xff] %v380
    // Predicated region
    $region22: #{tpu_custom_call.1} parent=1 // pred_check
      _
    $region23: #{tpu_custom_call.1} parent=1 // pred_check_branch
      %386 = sbr.rel (0) target = $region25
    $region24: #{tpu_custom_call.1} parent=1 // pred_region
      %s388 = ssub.s32 256, 256
      %389 = vsyncadd [#allocation4], %s388
      %s390 = sshll.u32 [#allocation7], 4
      %s391 = int_to_ptr.vmem [resolvable:$true] %s390
      %396 = dma.vmem_to_hbm [thread:$0]  %s391, 256, %s3, [#allocation4], 128, 128, 8
    $region25: #{tpu_custom_call.1} parent=1 // pred_fallthru
      _
    // Predicated region
    $region26: #{tpu_custom_call.1} parent=1 // pred_check
      _
    $region27: #{tpu_custom_call.1} parent=1 // pred_check_branch
      %398 = sbr.rel (0) target = $region29
    $region28: #{tpu_custom_call.1} parent=1 // pred_region
      %399 = dma.done [#allocation4], 256
    $region29: #{tpu_custom_call.1} parent=1 // pred_fallthru
      _
    %400 = vsyncpa [#allocation3], 1
    %401 = vsyncpa [#allocation6], 1
    %402 = vsyncpa [#allocation4], 1

</llo_original>
